<compile_context>
chip_gen: v6e
topology: v6e:2x2x1
jax: 0.10.0
libtpu: 0.0.40
codegen_flags: <defaults>
</compile_context>

<pallas_src>
import jax
import jax.numpy as jnp
import numpy as np
from jax.experimental import pallas as pl
from jax.experimental.pallas import tpu as pltpu

LATENT = 64          # latent_size
HIDDEN = 256         # fc1 / fc2 width
ACT_DIM = 6          # np.prod(env.single_action_space.shape)
ACT_PAD = 128        # lane-aligned padded action dim
SUBLANE = 8          # sublane alignment for the gridless path
SMALL_BATCH_MAX = 256   # <= this -> gridless whole-array-in-VMEM path
TARGET_TILE = 1024      # batch rows per grid step (multiple of 256)


def _cdiv(a, b):
    return (a + b - 1) // b


def _round_up(a, b):
    return _cdiv(a, b) * b


def actor_kernel(x_ref, w1_ref, b1_ref, w2_ref, b2_ref,
                 wmu_ref, bmu_ref, scale_ref, bias_ref, out_ref):
    # fc1: bf16 operands on the MXU, f32 accumulate; bias/relu stay f32.
    h1 = jnp.dot(x_ref[...], w1_ref[...], preferred_element_type=jnp.float32)
    h1 = jnp.maximum(h1 + b1_ref[...], 0.0)
    # fc2
    h2 = jnp.dot(h1.astype(jnp.bfloat16), w2_ref[...],
                 preferred_element_type=jnp.float32)
    h2 = jnp.maximum(h2 + b2_ref[...], 0.0)
    # fc_mu + tanh + action rescale (f32 elementwise, lane-dense 128-wide out).
    mu = jnp.dot(h2.astype(jnp.bfloat16), wmu_ref[...],
                 preferred_element_type=jnp.float32)
    mu = jnp.tanh(mu + bmu_ref[...])
    out_ref[...] = (mu * scale_ref[...] + bias_ref[...]).astype(out_ref.dtype)


def _pallas_actor_single(x, params):
    """Small batch: no grid, every operand whole-array resident in VMEM."""
    vmem = pl.BlockSpec(memory_space=pltpu.MemorySpace.VMEM)
    B = x.shape[0]
    return pl.pallas_call(
        actor_kernel,
        out_shape=jax.ShapeDtypeStruct((B, ACT_PAD), jnp.bfloat16),
        in_specs=[vmem] * 9,
        out_specs=vmem,
    )(x, *params)


def _pallas_actor_tiled(x, params, tile, nb):
    """Large batch: grid over batch tiles; weights resident (constant index_map)."""

    def const(shape):
        return pl.BlockSpec(shape, lambda i: (0, 0))

    return pl.pallas_call(
        actor_kernel,
        out_shape=jax.ShapeDtypeStruct((nb * tile, ACT_PAD), jnp.bfloat16),
        grid=(nb,),
        in_specs=[
            pl.BlockSpec((tile, LATENT), lambda i: (i, 0)),
            const((LATENT, HIDDEN)),
            const((1, HIDDEN)),
            const((HIDDEN, HIDDEN)),
            const((1, HIDDEN)),
            const((HIDDEN, ACT_PAD)),
            const((1, ACT_PAD)),
            const((1, ACT_PAD)),
            const((1, ACT_PAD)),
        ],
        out_specs=pl.BlockSpec((tile, ACT_PAD), lambda i: (i, 0)),
        compiler_params=pltpu.CompilerParams(
            dimension_semantics=("parallel",)),  # v7x: shard tiles over 2 TCs
    )(x, *params)


def actor_forward(x, params):
    """x: (B, LATENT) f32 -> (B, ACT_DIM) f32."""
    B = x.shape[0]
    # bf16 latents: halves the x HBM stream; matmuls accumulate in f32 anyway.
    x = x.astype(jnp.bfloat16)

    if B <= SMALL_BATCH_MAX:
        pad_to = _round_up(B, SUBLANE)
        if pad_to != B:
            x = jnp.pad(x, ((0, pad_to - B), (0, 0)))
        out = _pallas_actor_single(x, params)
    else:
        # Adaptive tiling: at least 2 tiles, even count (v7x 2-TC sharding),
        # tile <= TARGET_TILE and 256-aligned, padding stays modest.
        nb = max(2, _cdiv(B, TARGET_TILE))
        nb += nb % 2
        tile = max(256, _round_up(_cdiv(B, nb), 256))
        pad_to = nb * tile
        if pad_to != B:
            x = jnp.pad(x, ((0, pad_to - B), (0, 0)))
        out = _pallas_actor_tiled(x, params, tile, nb)

    # One slice + upcast outside the kernel: drop padded rows / padded lanes.
    return out[:B, :ACT_DIM].astype(jnp.float32)


def init_params(key):
    """Deterministic synthetic parameters (PyTorch Linear-like uniform init).

    Weights are stored bf16 (matmul operands); biases / scale / bias stay f32.
    Action-dim tensors are zero-padded to ACT_PAD lanes (padding must be
    exactly zero so lanes 6..127 of the output are inert).
    """
    ks = jax.random.split(key, 6)

    def linear(kw, kb, fan_in, fan_out):
        bound = 1.0 / np.sqrt(fan_in)
        w = jax.random.uniform(kw, (fan_in, fan_out), jnp.float32, -bound, bound)
        b = jax.random.uniform(kb, (1, fan_out), jnp.float32, -bound, bound)
        return w, b

    w1, b1 = linear(ks[0], ks[1], LATENT, HIDDEN)
    w2, b2 = linear(ks[2], ks[3], HIDDEN, HIDDEN)
    wmu, bmu = linear(ks[4], ks[5], HIDDEN, ACT_DIM)

    # action_scale / action_bias buffers: synthetic env with low=-2, high=2
    action_scale = jnp.full((ACT_DIM,), 2.0, jnp.float32)
    action_bias = jnp.full((ACT_DIM,), 0.0, jnp.float32)

    wmu_p = jnp.zeros((HIDDEN, ACT_PAD), jnp.float32).at[:, :ACT_DIM].set(wmu)
    bmu_p = jnp.zeros((1, ACT_PAD), jnp.float32).at[:, :ACT_DIM].set(bmu)
    scale_p = jnp.zeros((1, ACT_PAD), jnp.float32).at[:, :ACT_DIM].set(action_scale)
    bias_p = jnp.zeros((1, ACT_PAD), jnp.float32).at[:, :ACT_DIM].set(action_bias)

    return (w1.astype(jnp.bfloat16), b1,
            w2.astype(jnp.bfloat16), b2,
            wmu_p.astype(jnp.bfloat16), bmu_p,
            scale_p, bias_p)


def actor_reference(x, params):
    """Pure-JAX reference of the PyTorch forward (bf16 weights/input, f32 math)."""
    w1, b1, w2, b2, wmu_p, bmu_p, scale_p, bias_p = params
    xf = x.astype(jnp.bfloat16).astype(jnp.float32)  # wrapper feeds bf16 x
    h = jax.nn.relu(xf @ w1.astype(jnp.float32) + b1)
    h = jax.nn.relu(h @ w2.astype(jnp.float32) + b2)
    mu = jnp.tanh(h @ wmu_p.astype(jnp.float32) + bmu_p)
    out = mu * scale_p + bias_p
    return out[:, :ACT_DIM]


if __name__ == "__main__":
    key = jax.random.PRNGKey(0)
    kp, kx = jax.random.split(key)
    params = init_params(kp)

    # Small batch -> grid-free, whole-array-in-VMEM path.
    x = jax.random.normal(kx, (8, LATENT), jnp.float32)
    out = jax.block_until_ready(actor_forward(x, params))
    ref = actor_reference(x, params)
    np.testing.assert_allclose(np.asarray(out), np.asarray(ref),
                               rtol=2e-2, atol=2e-2)
    assert out.shape == (8, ACT_DIM)

    # Ragged larger batch -> adaptive tiled path (2 even tiles, 512 rows each).
    x_big = jax.random.normal(kx, (600, LATENT), jnp.float32)
    out_big = jax.block_until_ready(actor_forward(x_big, params))
    ref_big = actor_reference(x_big, params)
    np.testing.assert_allclose(np.asarray(out_big), np.asarray(ref_big),
                               rtol=2e-2, atol=2e-2)
    assert out_big.shape == (600, ACT_DIM)

    print("KERNEL_OK")
</pallas_src>

<mosaic_0001>
module attributes {stable_mosaic.version = 11 : i64} {
  func.func @actor_kernel(%arg0: memref<8x64xbf16, #tpu.memory_space<vmem>>, %arg1: memref<64x256xbf16, #tpu.memory_space<vmem>>, %arg2: memref<1x256xf32, #tpu.memory_space<vmem>>, %arg3: memref<256x256xbf16, #tpu.memory_space<vmem>>, %arg4: memref<1x256xf32, #tpu.memory_space<vmem>>, %arg5: memref<256x128xbf16, #tpu.memory_space<vmem>>, %arg6: memref<1x128xf32, #tpu.memory_space<vmem>>, %arg7: memref<1x128xf32, #tpu.memory_space<vmem>>, %arg8: memref<1x128xf32, #tpu.memory_space<vmem>>, %arg9: memref<8x128xbf16, #tpu.memory_space<vmem>>) attributes {dimension_semantics = [], scalar_prefetch = 0 : i64, scratch_operands = 0 : i64, tpu.core_type = #tpu.core_type<tc>} {
    %c0 = arith.constant 0 : index
    %c0_0 = arith.constant 0 : index
    %0 = vector.load %arg0[%c0, %c0_0] : memref<8x64xbf16, #tpu.memory_space<vmem>>, vector<8x64xbf16>
    %c0_1 = arith.constant 0 : index
    %c0_2 = arith.constant 0 : index
    %1 = vector.load %arg1[%c0_1, %c0_2] : memref<64x256xbf16, #tpu.memory_space<vmem>>, vector<64x256xbf16>
    %cst = arith.constant dense<0.000000e+00> : vector<8x256xf32>
    %2 = tpu.matmul %0, %1, %cst {dimension_numbers = #tpu.dot_dimension_numbers<[1], [0], [0], [1], [0, 0, 1, 1], [], []>} : vector<8x64xbf16>, vector<64x256xbf16>, vector<8x256xf32> -> vector<8x256xf32>
    %c0_3 = arith.constant 0 : index
    %c0_4 = arith.constant 0 : index
    %3 = vector.load %arg2[%c0_3, %c0_4] : memref<1x256xf32, #tpu.memory_space<vmem>>, vector<1x256xf32>
    %4 = vector.broadcast %3 : vector<1x256xf32> to vector<8x256xf32>
    %5 = arith.addf %2, %4 : vector<8x256xf32>
    %cst_5 = arith.constant 0.000000e+00 : f32
    %6 = vector.broadcast %cst_5 : f32 to vector<8x256xf32>
    %7 = arith.maximumf %5, %6 : vector<8x256xf32>
    %8 = arith.truncf %7 : vector<8x256xf32> to vector<8x256xbf16>
    %c0_6 = arith.constant 0 : index
    %c0_7 = arith.constant 0 : index
    %9 = vector.load %arg3[%c0_6, %c0_7] : memref<256x256xbf16, #tpu.memory_space<vmem>>, vector<256x256xbf16>
    %cst_8 = arith.constant dense<0.000000e+00> : vector<8x256xf32>
    %10 = tpu.matmul %8, %9, %cst_8 {dimension_numbers = #tpu.dot_dimension_numbers<[1], [0], [0], [1], [0, 0, 1, 1], [], []>} : vector<8x256xbf16>, vector<256x256xbf16>, vector<8x256xf32> -> vector<8x256xf32>
    %c0_9 = arith.constant 0 : index
    %c0_10 = arith.constant 0 : index
    %11 = vector.load %arg4[%c0_9, %c0_10] : memref<1x256xf32, #tpu.memory_space<vmem>>, vector<1x256xf32>
    %12 = vector.broadcast %11 : vector<1x256xf32> to vector<8x256xf32>
    %13 = arith.addf %10, %12 : vector<8x256xf32>
    %cst_11 = arith.constant 0.000000e+00 : f32
    %14 = vector.broadcast %cst_11 : f32 to vector<8x256xf32>
    %15 = arith.maximumf %13, %14 : vector<8x256xf32>
    %16 = arith.truncf %15 : vector<8x256xf32> to vector<8x256xbf16>
    %c0_12 = arith.constant 0 : index
    %c0_13 = arith.constant 0 : index
    %17 = vector.load %arg5[%c0_12, %c0_13] : memref<256x128xbf16, #tpu.memory_space<vmem>>, vector<256x128xbf16>
    %cst_14 = arith.constant dense<0.000000e+00> : vector<8x128xf32>
    %18 = tpu.matmul %16, %17, %cst_14 {dimension_numbers = #tpu.dot_dimension_numbers<[1], [0], [0], [1], [0, 0, 1, 1], [], []>} : vector<8x256xbf16>, vector<256x128xbf16>, vector<8x128xf32> -> vector<8x128xf32>
    %c0_15 = arith.constant 0 : index
    %c0_16 = arith.constant 0 : index
    %19 = vector.load %arg6[%c0_15, %c0_16] : memref<1x128xf32, #tpu.memory_space<vmem>>, vector<1x128xf32>
    %20 = vector.broadcast %19 : vector<1x128xf32> to vector<8x128xf32>
    %21 = arith.addf %18, %20 : vector<8x128xf32>
    %22 = math.tanh %21 : vector<8x128xf32>
    %c0_17 = arith.constant 0 : index
    %c0_18 = arith.constant 0 : index
    %23 = vector.load %arg7[%c0_17, %c0_18] : memref<1x128xf32, #tpu.memory_space<vmem>>, vector<1x128xf32>
    %24 = vector.broadcast %23 : vector<1x128xf32> to vector<8x128xf32>
    %25 = arith.mulf %22, %24 : vector<8x128xf32>
    %c0_19 = arith.constant 0 : index
    %c0_20 = arith.constant 0 : index
    %26 = vector.load %arg8[%c0_19, %c0_20] : memref<1x128xf32, #tpu.memory_space<vmem>>, vector<1x128xf32>
    %27 = vector.broadcast %26 : vector<1x128xf32> to vector<8x128xf32>
    %28 = arith.addf %25, %27 : vector<8x128xf32>
    %29 = arith.truncf %28 : vector<8x128xf32> to vector<8x128xbf16>
    %c0_21 = arith.constant 0 : index
    %c0_22 = arith.constant 0 : index
    %30 = vector.load %arg9[%c0_21, %c0_22] : memref<8x128xbf16, #tpu.memory_space<vmem>>, vector<8x128xbf16>
    tpu.vector_store %arg9[%c0_21, %c0_22], %29 {strides = array<i32>} : memref<8x128xbf16, #tpu.memory_space<vmem>>, vector<8x128xbf16>,
    return
  }
}

</mosaic_0001>

<llo_original>
// kernel: tpu_custom_call.1
$region0: #{tpu_custom_call.1}
  #allocation0 [shape = 'u32[]', space=smem, size = 0x4, offset = 0x4, fixed_abs, tag = 'smem constant byte address 0x4 - core index']
  #allocation1 [shape = 'u32[144,128]{1,0:T(1,128)}', space=vmem, size = 0x12000, scoped, tag = 'internal scratch']
  %s0 = inlined_call_operand.hbm [shape: bf16[8,64], index: 0, kind: input, shape index: {}]
  %s1 = inlined_call_operand.hbm [shape: bf16[64,256], index: 1, kind: input, shape index: {}]
  %s2 = inlined_call_operand.vmem [shape: f32[1,256], index: 2, kind: input, shape index: {}]
  %s3 = inlined_call_operand.hbm [shape: bf16[256,256], index: 3, kind: input, shape index: {}]
  %s4 = inlined_call_operand.vmem [shape: f32[1,256], index: 4, kind: input, shape index: {}]
  %s5 = inlined_call_operand.hbm [shape: bf16[256,128], index: 5, kind: input, shape index: {}]
  %s6 = inlined_call_operand.vmem [shape: f32[1,128], index: 6, kind: input, shape index: {}]
  %s7 = inlined_call_operand.vmem [shape: f32[1,128], index: 7, kind: input, shape index: {}]
  %s8 = inlined_call_operand.vmem [shape: f32[1,128], index: 8, kind: input, shape index: {}]
  %s9 = inlined_call_operand.hbm [shape: bf16[8,128], index: 9, kind: output, shape index: {}]
  %s10 = sld [smem:[#allocation0]]
  $region62: #{tpu_custom_call.1} parent=0
    _
  %s12 = ssub.s32 1, %s10
  %s13 = scalar_select 0, %s12, %s10
  $region1: #{tpu_custom_call.1} parent=0
    #allocation2 [shape = 'u8[2048]{0}', space=vmem, size = 0x800, scoped, tag = 'input window, operand 0, single buffered']
    #allocation3 [shape = 's32[1]{0}', space=sflag, size = 0x4, scoped, tag = 'scoped memory for tpu_custom_call.1']
    #allocation4 [shape = 's32[1]{0}', space=sflag, size = 0x4, scoped, tag = 'scoped memory for tpu_custom_call.1']
    #allocation5 [shape = 'u8[32768]{0}', space=vmem, size = 0x8000, scoped, tag = 'input window, operand 1, single buffered']
    #allocation6 [shape = 's32[1]{0}', space=sflag, size = 0x4, scoped, tag = 'scoped memory for tpu_custom_call.1']
    #allocation7 [shape = 'u8[131072]{0}', space=vmem, size = 0x20000, scoped, tag = 'input window, operand 3, single buffered']
    #allocation8 [shape = 'u8[65536]{0}', space=vmem, size = 0x10000, scoped, tag = 'input window, operand 5, single buffered']
    #allocation9 [shape = 's32[1]{0}', space=sflag, size = 0x4, scoped, tag = 'scoped memory for tpu_custom_call.1']
    #allocation10 [shape = 'u8[2048]{0}', space=vmem, size = 0x800, scoped, tag = 'output window, operand 0, single buffered']
    %14 = vsyncpa [#allocation3], 0
    %15 = vsyncpa [#allocation6], 0
    %16 = vsyncpa [#allocation9], 0
    %17 = vsyncpa [#allocation4], 0
    // Predicated region
    $region2: #{tpu_custom_call.1} parent=1 // pred_check
      _
    $region3: #{tpu_custom_call.1} parent=1 // pred_check_branch
      %19 = sbr.rel (0) target = $region5
    $region4: #{tpu_custom_call.1} parent=1 // pred_region
      %s21 = ssub.s32 64, 64
      %22 = vsyncadd [#allocation3], %s21
      %s24 = sshll.u32 [#allocation2], 4
      %s25 = int_to_ptr.vmem [resolvable:$true] %s24
      %27 = dma.hbm_to_vmem [thread:$0]  %s0, 64, %s25, [#allocation3]
    $region5: #{tpu_custom_call.1} parent=1 // pred_fallthru
      _
    // Predicated region
    $region6: #{tpu_custom_call.1} parent=1 // pred_check
      _
    $region7: #{tpu_custom_call.1} parent=1 // pred_check_branch
      %29 = sbr.rel (0) target = $region9
    $region8: #{tpu_custom_call.1} parent=1 // pred_region
      %s31 = ssub.s32 1024, 1024
      %32 = vsyncadd [#allocation6], %s31
      %s33 = sshll.u32 [#allocation5], 4
      %s34 = int_to_ptr.vmem [resolvable:$true] %s33
      %39 = dma.hbm_to_vmem [thread:$0]  %s1, 1024, %s34, [#allocation6], 128, 128, 8
    $region9: #{tpu_custom_call.1} parent=1 // pred_fallthru
      _
    // Predicated region
    $region10: #{tpu_custom_call.1} parent=1 // pred_check
      _
    $region11: #{tpu_custom_call.1} parent=1 // pred_check_branch
      %41 = sbr.rel (0) target = $region13
    $region12: #{tpu_custom_call.1} parent=1 // pred_region
      _
    $region13: #{tpu_custom_call.1} parent=1 // pred_fallthru
      _
    // Predicated region
    $region14: #{tpu_custom_call.1} parent=1 // pred_check
      _
    $region15: #{tpu_custom_call.1} parent=1 // pred_check_branch
      %43 = sbr.rel (0) target = $region17
    $region16: #{tpu_custom_call.1} parent=1 // pred_region
      %s45 = ssub.s32 4096, 4096
      %46 = vsyncadd [#allocation6], %s45
      %s47 = sshll.u32 [#allocation7], 4
      %s48 = int_to_ptr.vmem [resolvable:$true] %s47
      %53 = dma.hbm_to_vmem [thread:$0]  %s3, 4096, %s48, [#allocation6], 128, 128, 8
    $region17: #{tpu_custom_call.1} parent=1 // pred_fallthru
      _
    // Predicated region
    $region18: #{tpu_custom_call.1} parent=1 // pred_check
      _
    $region19: #{tpu_custom_call.1} parent=1 // pred_check_branch
      %55 = sbr.rel (0) target = $region21
    $region20: #{tpu_custom_call.1} parent=1 // pred_region
      _
    $region21: #{tpu_custom_call.1} parent=1 // pred_fallthru
      _
    // Predicated region
    $region22: #{tpu_custom_call.1} parent=1 // pred_check
      _
    $region23: #{tpu_custom_call.1} parent=1 // pred_check_branch
      %57 = sbr.rel (0) target = $region25
    $region24: #{tpu_custom_call.1} parent=1 // pred_region
      %s59 = ssub.s32 2048, 2048
      %60 = vsyncadd [#allocation9], %s59
      %s61 = sshll.u32 [#allocation8], 4
      %s62 = int_to_ptr.vmem [resolvable:$true] %s61
      %67 = dma.hbm_to_vmem [thread:$0]  %s5, 2048, %s62, [#allocation9], 64, 64, 4
    $region25: #{tpu_custom_call.1} parent=1 // pred_fallthru
      _
    // Predicated region
    $region26: #{tpu_custom_call.1} parent=1 // pred_check
      _
    $region27: #{tpu_custom_call.1} parent=1 // pred_check_branch
      %69 = sbr.rel (0) target = $region29
    $region28: #{tpu_custom_call.1} parent=1 // pred_region
      _
    $region29: #{tpu_custom_call.1} parent=1 // pred_fallthru
      _
    // Predicated region
    $region30: #{tpu_custom_call.1} parent=1 // pred_check
      _
    $region31: #{tpu_custom_call.1} parent=1 // pred_check_branch
      %71 = sbr.rel (0) target = $region33
    $region32: #{tpu_custom_call.1} parent=1 // pred_region
      _
    $region33: #{tpu_custom_call.1} parent=1 // pred_fallthru
      _
    // Predicated region
    $region34: #{tpu_custom_call.1} parent=1 // pred_check
      _
    $region35: #{tpu_custom_call.1} parent=1 // pred_check_branch
      %73 = sbr.rel (0) target = $region37
    $region36: #{tpu_custom_call.1} parent=1 // pred_region
      _
    $region37: #{tpu_custom_call.1} parent=1 // pred_fallthru
      _
    // Predicated region
    $region38: #{tpu_custom_call.1} parent=1 // pred_check
      _
    $region39: #{tpu_custom_call.1} parent=1 // pred_check_branch
      %75 = sbr.rel (0) target = $region41
    $region40: #{tpu_custom_call.1} parent=1 // pred_region
      %76 = dma.done [#allocation3], 64
    $region41: #{tpu_custom_call.1} parent=1 // pred_fallthru
      _
    // Predicated region
    $region42: #{tpu_custom_call.1} parent=1 // pred_check
      _
    $region43: #{tpu_custom_call.1} parent=1 // pred_check_branch
      %78 = sbr.rel (0) target = $region45
    $region44: #{tpu_custom_call.1} parent=1 // pred_region
      %79 = dma.done [#allocation6], 1024
    $region45: #{tpu_custom_call.1} parent=1 // pred_fallthru
      _
    // Predicated region
    $region46: #{tpu_custom_call.1} parent=1 // pred_check
      _
    $region47: #{tpu_custom_call.1} parent=1 // pred_check_branch
      %81 = sbr.rel (0) target = $region49
    $region48: #{tpu_custom_call.1} parent=1 // pred_region
      %82 = dma.done [#allocation6], 4096
    $region49: #{tpu_custom_call.1} parent=1 // pred_fallthru
      _
    // Predicated region
    $region50: #{tpu_custom_call.1} parent=1 // pred_check
      _
    $region51: #{tpu_custom_call.1} parent=1 // pred_check_branch
      %84 = sbr.rel (0) target = $region53
    $region52: #{tpu_custom_call.1} parent=1 // pred_region
      %85 = dma.done [#allocation9], 2048
    $region53: #{tpu_custom_call.1} parent=1 // pred_fallthru
      _
    %v87 = vld [vmem:[#allocation2] sm:$0xf]
    %v88 = vld [vmem:[#allocation5] sm:$0xff]
    %v89 = vld [vmem:[#allocation5 + $0x8] sm:$0xff]
    %v90 = vld [vmem:[#allocation5 + $0x10] sm:$0xff]
    %v91 = vld [vmem:[#allocation5 + $0x18] sm:$0xff]
    %v92 = vld [vmem:[#allocation5 + $0x20] sm:$0xff]
    %v93 = vld [vmem:[#allocation5 + $0x28] sm:$0xff]
    %v94 = vld [vmem:[#allocation5 + $0x30] sm:$0xff]
    %v95 = vld [vmem:[#allocation5 + $0x38] sm:$0xff]
    %v96 = vld [vmem:[%s2] sm:$0x3]
    %v98 = vlaneseq
    %v99 = vshrl.u32 %v98, 7
    %v100 = vsub.s32 0, %v99
    %v101 = vrot.slane %v96, %v100
    %v102 = vlaneseq
    %v103 = vshrl.u32 %v102, 7
    %v104 = vsub.s32 1, %v103
    %v105 = vrot.slane %v96, %v104
    %v116 = vunpack.c.l.b16 %v88
    %v117 = vunpack.c.h.b16 %v88
    %v118 = vunpack.c.l.b16 %v89
    %v119 = vunpack.c.h.b16 %v89
    %v120 = vunpack.c.l.b16 %v90
    %v121 = vunpack.c.h.b16 %v90
    %v122 = vunpack.c.l.b16 %v91
    %v123 = vunpack.c.h.b16 %v91
    %v124 = vunpack.c.l.b16 %v92
    %v125 = vunpack.c.h.b16 %v92
    %v126 = vunpack.c.l.b16 %v93
    %v127 = vunpack.c.h.b16 %v93
    %v128 = vunpack.c.l.b16 %v94
    %v129 = vunpack.c.h.b16 %v94
    %v130 = vunpack.c.l.b16 %v95
    %v131 = vunpack.c.h.b16 %v95
    %v132 = vpack.c.b16 %v118, %v116
    %v133 = vpack.c.b16 %v119, %v117
    %v134 = vpack.c.b16 %v122, %v120
    %v135 = vpack.c.b16 %v123, %v121
    %v136 = vpack.c.b16 %v126, %v124
    %v137 = vpack.c.b16 %v127, %v125
    %v138 = vpack.c.b16 %v130, %v128
    %v139 = vpack.c.b16 %v131, %v129
    %vm148 = vcmask 523264
    %v150 = vsel %vm148, %v87, 0
    %152 = vmatprep.subr.bf16.mxu0 0
    %153 = vmatpush1.bf16.msra.mxu0 0
    %154 = vmatprep.subr.bf16.mxu0 0
    %155 = vmatpush1.bf16.msra.mxu0 0
    %156 = vmatprep.subr.bf16.mxu0 0
    %157 = vmatpush1.bf16.msra.mxu0 0
    %158 = vmatprep.subr.bf16.mxu0 0
    %159 = vmatpush1.bf16.msra.mxu0 0
    %160 = vmatprep.subr.bf16.mxu0 %v139
    %161 = vmatpush1.bf16.msra.mxu0 %v138
    %162 = vmatprep.subr.bf16.mxu0 %v137
    %163 = vmatpush1.bf16.msra.mxu0 %v136
    %164 = vmatprep.subr.bf16.mxu0 %v135
    %165 = vmatpush1.bf16.msra.mxu0 %v134
    %166 = vmatprep.subr.bf16.mxu0 %v133
    %167 = vmatpush1.bf16.msra.mxu0 %v132
    %168 = vmatprep.subr.bf16.mxu0 0
    %169 = vmatpush2.bf16.msra.mxu0 0
    %170 = vmatprep.subr.bf16.mxu0 0
    %171 = vmatpush2.bf16.msra.mxu0 0
    %172 = vmatprep.subr.bf16.mxu0 0
    %173 = vmatpush2.bf16.msra.mxu0 0
    %174 = vmatprep.subr.bf16.mxu0 0
    %175 = vmatpush2.bf16.msra.mxu0 0
    %176 = vmatprep.subr.bf16.mxu0 0
    %177 = vmatpush2.bf16.msra.mxu0 0
    %178 = vmatprep.subr.bf16.mxu0 0
    %179 = vmatpush2.bf16.msra.mxu0 0
    %180 = vmatprep.subr.bf16.mxu0 0
    %181 = vmatpush2.bf16.msra.mxu0 0
    %182 = vmatprep.subr.bf16.mxu0 0
    %183 = vmatpush2.bf16.msra.mxu0 0
    %184 = vmatprep.mubr.bf16.mxu0 0
    %185 = vmatmul.mubr.bf16.gmra.mxu0 %v150
    %v186 = vpop.f32.mrf.mxu0
    %v187 = vadd.f32 %v101, %v186
    %v188 = vpop.f32.mrf.mxu0
    %v189 = vadd.f32 %v105, %v188
    %v190 = vpop.f32.mrf.mxu0
    %v191 = vpop.f32.mrf.mxu0
    %192 = vdwg.mxu0
    %v193 = vmax.f32 %v187, 0.0
    %v194 = vmax.f32 %v189, 0.0
    %v195 = vpack.c.bf16 %v193, %v193
    %v196 = vpack.c.bf16 %v194, %v194
    %v197 = vld [vmem:[#allocation7] sm:$0xff]
    %v198 = vld [vmem:[#allocation7 + $0x8] sm:$0xff]
    %v199 = vld [vmem:[#allocation7 + $0x10] sm:$0xff]
    %v200 = vld [vmem:[#allocation7 + $0x18] sm:$0xff]
    %v201 = vld [vmem:[#allocation7 + $0x20] sm:$0xff]
    %v202 = vld [vmem:[#allocation7 + $0x28] sm:$0xff]
    %v203 = vld [vmem:[#allocation7 + $0x30] sm:$0xff]
    %v204 = vld [vmem:[#allocation7 + $0x38] sm:$0xff]
    %v205 = vld [vmem:[#allocation7 + $0x40] sm:$0xff]
    %v206 = vld [vmem:[#allocation7 + $0x48] sm:$0xff]
    %v207 = vld [vmem:[#allocation7 + $0x50] sm:$0xff]
    %v208 = vld [vmem:[#allocation7 + $0x58] sm:$0xff]
    %v209 = vld [vmem:[#allocation7 + $0x60] sm:$0xff]
    %v210 = vld [vmem:[#allocation7 + $0x68] sm:$0xff]
    %v211 = vld [vmem:[#allocation7 + $0x70] sm:$0xff]
    %v212 = vld [vmem:[#allocation7 + $0x78] sm:$0xff]
    %v213 = vld [vmem:[#allocation7 + $0x80] sm:$0xff]
    %v214 = vld [vmem:[#allocation7 + $0x88] sm:$0xff]
    %v215 = vld [vmem:[#allocation7 + $0x90] sm:$0xff]
    %v216 = vld [vmem:[#allocation7 + $0x98] sm:$0xff]
    %v217 = vld [vmem:[#allocation7 + $0xa0] sm:$0xff]
    %v218 = vld [vmem:[#allocation7 + $0xa8] sm:$0xff]
    %v219 = vld [vmem:[#allocation7 + $0xb0] sm:$0xff]
    %v220 = vld [vmem:[#allocation7 + $0xb8] sm:$0xff]
    %v221 = vld [vmem:[#allocation7 + $0xc0] sm:$0xff]
    %v222 = vld [vmem:[#allocation7 + $0xc8] sm:$0xff]
    %v223 = vld [vmem:[#allocation7 + $0xd0] sm:$0xff]
    %v224 = vld [vmem:[#allocation7 + $0xd8] sm:$0xff]
    %v225 = vld [vmem:[#allocation7 + $0xe0] sm:$0xff]
    %v226 = vld [vmem:[#allocation7 + $0xe8] sm:$0xff]
    %v227 = vld [vmem:[#allocation7 + $0xf0] sm:$0xff]
    %v228 = vld [vmem:[#allocation7 + $0xf8] sm:$0xff]
    %v229 = vld [vmem:[%s4] sm:$0x3]
    %v231 = vlaneseq
    %v232 = vshrl.u32 %v231, 7
    %v233 = vsub.s32 0, %v232
    %v234 = vrot.slane %v229, %v233
    %v235 = vlaneseq
    %v236 = vshrl.u32 %v235, 7
    %v237 = vsub.s32 1, %v236
    %v238 = vrot.slane %v229, %v237
    %v273 = vunpack.c.l.b16 %v197
    %v274 = vunpack.c.h.b16 %v197
    %v275 = vunpack.c.l.b16 %v198
    %v276 = vunpack.c.h.b16 %v198
    %v277 = vunpack.c.l.b16 %v199
    %v278 = vunpack.c.h.b16 %v199
    %v279 = vunpack.c.l.b16 %v200
    %v280 = vunpack.c.h.b16 %v200
    %v281 = vunpack.c.l.b16 %v201
    %v282 = vunpack.c.h.b16 %v201
    %v283 = vunpack.c.l.b16 %v202
    %v284 = vunpack.c.h.b16 %v202
    %v285 = vunpack.c.l.b16 %v203
    %v286 = vunpack.c.h.b16 %v203
    %v287 = vunpack.c.l.b16 %v204
    %v288 = vunpack.c.h.b16 %v204
    %v289 = vunpack.c.l.b16 %v205
    %v290 = vunpack.c.h.b16 %v205
    %v291 = vunpack.c.l.b16 %v206
    %v292 = vunpack.c.h.b16 %v206
    %v293 = vunpack.c.l.b16 %v207
    %v294 = vunpack.c.h.b16 %v207
    %v295 = vunpack.c.l.b16 %v208
    %v296 = vunpack.c.h.b16 %v208
    %v297 = vunpack.c.l.b16 %v209
    %v298 = vunpack.c.h.b16 %v209
    %v299 = vunpack.c.l.b16 %v210
    %v300 = vunpack.c.h.b16 %v210
    %v301 = vunpack.c.l.b16 %v211
    %v302 = vunpack.c.h.b16 %v211
    %v303 = vunpack.c.l.b16 %v212
    %v304 = vunpack.c.h.b16 %v212
    %v305 = vunpack.c.l.b16 %v213
    %v306 = vunpack.c.h.b16 %v213
    %v307 = vunpack.c.l.b16 %v214
    %v308 = vunpack.c.h.b16 %v214
    %v309 = vunpack.c.l.b16 %v215
    %v310 = vunpack.c.h.b16 %v215
    %v311 = vunpack.c.l.b16 %v216
    %v312 = vunpack.c.h.b16 %v216
    %v313 = vunpack.c.l.b16 %v217
    %v314 = vunpack.c.h.b16 %v217
    %v315 = vunpack.c.l.b16 %v218
    %v316 = vunpack.c.h.b16 %v218
    %v317 = vunpack.c.l.b16 %v219
    %v318 = vunpack.c.h.b16 %v219
    %v319 = vunpack.c.l.b16 %v220
    %v320 = vunpack.c.h.b16 %v220
    %v321 = vunpack.c.l.b16 %v221
    %v322 = vunpack.c.h.b16 %v221
    %v323 = vunpack.c.l.b16 %v222
    %v324 = vunpack.c.h.b16 %v222
    %v325 = vunpack.c.l.b16 %v223
    %v326 = vunpack.c.h.b16 %v223
    %v327 = vunpack.c.l.b16 %v224
    %v328 = vunpack.c.h.b16 %v224
    %v329 = vunpack.c.l.b16 %v225
    %v330 = vunpack.c.h.b16 %v225
    %v331 = vunpack.c.l.b16 %v226
    %v332 = vunpack.c.h.b16 %v226
    %v333 = vunpack.c.l.b16 %v227
    %v334 = vunpack.c.h.b16 %v227
    %v335 = vunpack.c.l.b16 %v228
    %v336 = vunpack.c.h.b16 %v228
    %v337 = vpack.c.b16 %v275, %v273
    %v338 = vpack.c.b16 %v276, %v274
    %v339 = vpack.c.b16 %v279, %v277
    %v340 = vpack.c.b16 %v280, %v278
    %v341 = vpack.c.b16 %v283, %v281
    %v342 = vpack.c.b16 %v284, %v282
    %v343 = vpack.c.b16 %v287, %v285
    %v344 = vpack.c.b16 %v288, %v286
    %v345 = vpack.c.b16 %v291, %v289
    %v346 = vpack.c.b16 %v292, %v290
    %v347 = vpack.c.b16 %v295, %v293
    %v348 = vpack.c.b16 %v296, %v294
    %v349 = vpack.c.b16 %v299, %v297
    %v350 = vpack.c.b16 %v300, %v298
    %v351 = vpack.c.b16 %v303, %v301
    %v352 = vpack.c.b16 %v304, %v302
    %v353 = vpack.c.b16 %v307, %v305
    %v354 = vpack.c.b16 %v308, %v306
    %v355 = vpack.c.b16 %v311, %v309
    %v356 = vpack.c.b16 %v312, %v310
    %v357 = vpack.c.b16 %v315, %v313
    %v358 = vpack.c.b16 %v316, %v314
    %v359 = vpack.c.b16 %v319, %v317
    %v360 = vpack.c.b16 %v320, %v318
    %v361 = vpack.c.b16 %v323, %v321
    %v362 = vpack.c.b16 %v324, %v322
    %v363 = vpack.c.b16 %v327, %v325
    %v364 = vpack.c.b16 %v328, %v326
    %v365 = vpack.c.b16 %v331, %v329
    %v366 = vpack.c.b16 %v332, %v330
    %v367 = vpack.c.b16 %v335, %v333
    %v368 = vpack.c.b16 %v336, %v334
    %401 = vmatprep.subr.bf16.mxu0 %v352
    %402 = vmatpush1.bf16.msra.mxu0 %v351
    %403 = vmatprep.subr.bf16.mxu0 %v350
    %404 = vmatpush1.bf16.msra.mxu0 %v349
    %405 = vmatprep.subr.bf16.mxu0 %v348
    %406 = vmatpush1.bf16.msra.mxu0 %v347
    %407 = vmatprep.subr.bf16.mxu0 %v346
    %408 = vmatpush1.bf16.msra.mxu0 %v345
    %409 = vmatprep.subr.bf16.mxu0 %v344
    %410 = vmatpush1.bf16.msra.mxu0 %v343
    %411 = vmatprep.subr.bf16.mxu0 %v342
    %412 = vmatpush1.bf16.msra.mxu0 %v341
    %413 = vmatprep.subr.bf16.mxu0 %v340
    %414 = vmatpush1.bf16.msra.mxu0 %v339
    %415 = vmatprep.subr.bf16.mxu0 %v338
    %416 = vmatpush1.bf16.msra.mxu0 %v337
    %417 = vmatprep.subr.bf16.mxu0 %v368
    %418 = vmatpush2.bf16.msra.mxu0 %v367
    %419 = vmatprep.subr.bf16.mxu0 %v366
    %420 = vmatpush2.bf16.msra.mxu0 %v365
    %421 = vmatprep.subr.bf16.mxu0 %v364
    %422 = vmatpush2.bf16.msra.mxu0 %v363
    %423 = vmatprep.subr.bf16.mxu0 %v362
    %424 = vmatpush2.bf16.msra.mxu0 %v361
    %425 = vmatprep.subr.bf16.mxu0 %v360
    %426 = vmatpush2.bf16.msra.mxu0 %v359
    %427 = vmatprep.subr.bf16.mxu0 %v358
    %428 = vmatpush2.bf16.msra.mxu0 %v357
    %429 = vmatprep.subr.bf16.mxu0 %v356
    %430 = vmatpush2.bf16.msra.mxu0 %v355
    %431 = vmatprep.subr.bf16.mxu0 %v354
    %432 = vmatpush2.bf16.msra.mxu0 %v353
    %433 = vmatprep.mubr.bf16.mxu0 %v196
    %434 = vmatmul.mubr.bf16.gmra.mxu0 %v195
    %v435 = vpop.f32.mrf.mxu0
    %v436 = vadd.f32 %v234, %v435
    %v437 = vpop.f32.mrf.mxu0
    %v438 = vadd.f32 %v238, %v437
    %v439 = vpop.f32.mrf.mxu0
    %v440 = vpop.f32.mrf.mxu0
    %441 = vdwg.mxu0
    %v442 = vmax.f32 %v436, 0.0
    %v443 = vmax.f32 %v438, 0.0
    %v444 = vpack.c.bf16 %v442, %v442
    %v445 = vpack.c.bf16 %v443, %v443
    %v446 = vld [vmem:[#allocation8] sm:$0xf]
    %v447 = vld [vmem:[#allocation8 + $0x4] sm:$0xf]
    %v448 = vld [vmem:[#allocation8 + $0x8] sm:$0xf]
    %v449 = vld [vmem:[#allocation8 + $0xc] sm:$0xf]
    %v450 = vld [vmem:[#allocation8 + $0x10] sm:$0xf]
    %v451 = vld [vmem:[#allocation8 + $0x14] sm:$0xf]
    %v452 = vld [vmem:[#allocation8 + $0x18] sm:$0xf]
    %v453 = vld [vmem:[#allocation8 + $0x1c] sm:$0xf]
    %v454 = vld [vmem:[#allocation8 + $0x20] sm:$0xf]
    %v455 = vld [vmem:[#allocation8 + $0x24] sm:$0xf]
    %v456 = vld [vmem:[#allocation8 + $0x28] sm:$0xf]
    %v457 = vld [vmem:[#allocation8 + $0x2c] sm:$0xf]
    %v458 = vld [vmem:[#allocation8 + $0x30] sm:$0xf]
    %v459 = vld [vmem:[#allocation8 + $0x34] sm:$0xf]
    %v460 = vld [vmem:[#allocation8 + $0x38] sm:$0xf]
    %v461 = vld [vmem:[#allocation8 + $0x3c] sm:$0xf]
    %v462 = vld [vmem:[#allocation8 + $0x40] sm:$0xf]
    %v463 = vld [vmem:[#allocation8 + $0x44] sm:$0xf]
    %v464 = vld [vmem:[#allocation8 + $0x48] sm:$0xf]
    %v465 = vld [vmem:[#allocation8 + $0x4c] sm:$0xf]
    %v466 = vld [vmem:[#allocation8 + $0x50] sm:$0xf]
    %v467 = vld [vmem:[#allocation8 + $0x54] sm:$0xf]
    %v468 = vld [vmem:[#allocation8 + $0x58] sm:$0xf]
    %v469 = vld [vmem:[#allocation8 + $0x5c] sm:$0xf]
    %v470 = vld [vmem:[#allocation8 + $0x60] sm:$0xf]
    %v471 = vld [vmem:[#allocation8 + $0x64] sm:$0xf]
    %v472 = vld [vmem:[#allocation8 + $0x68] sm:$0xf]
    %v473 = vld [vmem:[#allocation8 + $0x6c] sm:$0xf]
    %v474 = vld [vmem:[#allocation8 + $0x70] sm:$0xf]
    %v475 = vld [vmem:[#allocation8 + $0x74] sm:$0xf]
    %v476 = vld [vmem:[#allocation8 + $0x78] sm:$0xf]
    %v477 = vld [vmem:[#allocation8 + $0x7c] sm:$0xf]
    %v478 = vld [vmem:[%s6] sm:$0x1]
    %v480 = vlaneseq
    %v481 = vshrl.u32 %v480, 7
    %v482 = vsub.s32 0, %v481
    %v483 = vrot.slane %v478, %v482
    %v517 = vunpack.c.l.b16 %v446
    %v518 = vunpack.c.l.b16 %v447
    %v519 = vunpack.c.l.b16 %v448
    %v520 = vunpack.c.l.b16 %v449
    %v521 = vunpack.c.l.b16 %v450
    %v522 = vunpack.c.l.b16 %v451
    %v523 = vunpack.c.l.b16 %v452
    %v524 = vunpack.c.l.b16 %v453
    %v525 = vunpack.c.l.b16 %v454
    %v526 = vunpack.c.l.b16 %v455
    %v527 = vunpack.c.l.b16 %v456
    %v528 = vunpack.c.l.b16 %v457
    %v529 = vunpack.c.l.b16 %v458
    %v530 = vunpack.c.l.b16 %v459
    %v531 = vunpack.c.l.b16 %v460
    %v532 = vunpack.c.l.b16 %v461
    %v533 = vunpack.c.l.b16 %v462
    %v534 = vunpack.c.l.b16 %v463
    %v535 = vunpack.c.l.b16 %v464
    %v536 = vunpack.c.l.b16 %v465
    %v537 = vunpack.c.l.b16 %v466
    %v538 = vunpack.c.l.b16 %v467
    %v539 = vunpack.c.l.b16 %v468
    %v540 = vunpack.c.l.b16 %v469
    %v541 = vunpack.c.l.b16 %v470
    %v542 = vunpack.c.l.b16 %v471
    %v543 = vunpack.c.l.b16 %v472
    %v544 = vunpack.c.l.b16 %v473
    %v545 = vunpack.c.l.b16 %v474
    %v546 = vunpack.c.l.b16 %v475
    %v547 = vunpack.c.l.b16 %v476
    %v548 = vunpack.c.l.b16 %v477
    %v549 = vpack.c.b16 %v518, %v517
    %v550 = vpack.c.b16 %v520, %v519
    %v551 = vpack.c.b16 %v522, %v521
    %v552 = vpack.c.b16 %v524, %v523
    %v553 = vpack.c.b16 %v526, %v525
    %v554 = vpack.c.b16 %v528, %v527
    %v555 = vpack.c.b16 %v530, %v529
    %v556 = vpack.c.b16 %v532, %v531
    %v557 = vpack.c.b16 %v534, %v533
    %v558 = vpack.c.b16 %v536, %v535
    %v559 = vpack.c.b16 %v538, %v537
    %v560 = vpack.c.b16 %v540, %v539
    %v561 = vpack.c.b16 %v542, %v541
    %v562 = vpack.c.b16 %v544, %v543
    %v563 = vpack.c.b16 %v546, %v545
    %v564 = vpack.c.b16 %v548, %v547
    %581 = vmatprep.subr.bf16.mxu0 0
    %582 = vmatpush1.bf16.msra.mxu0 %v556
    %583 = vmatprep.subr.bf16.mxu0 0
    %584 = vmatpush1.bf16.msra.mxu0 %v555
    %585 = vmatprep.subr.bf16.mxu0 0
    %586 = vmatpush1.bf16.msra.mxu0 %v554
    %587 = vmatprep.subr.bf16.mxu0 0
    %588 = vmatpush1.bf16.msra.mxu0 %v553
    %589 = vmatprep.subr.bf16.mxu0 0
    %590 = vmatpush1.bf16.msra.mxu0 %v552
    %591 = vmatprep.subr.bf16.mxu0 0
    %592 = vmatpush1.bf16.msra.mxu0 %v551
    %593 = vmatprep.subr.bf16.mxu0 0
    %594 = vmatpush1.bf16.msra.mxu0 %v550
    %595 = vmatprep.subr.bf16.mxu0 0
    %596 = vmatpush1.bf16.msra.mxu0 %v549
    %597 = vmatprep.subr.bf16.mxu0 0
    %598 = vmatpush2.bf16.msra.mxu0 %v564
    %599 = vmatprep.subr.bf16.mxu0 0
    %600 = vmatpush2.bf16.msra.mxu0 %v563
    %601 = vmatprep.subr.bf16.mxu0 0
    %602 = vmatpush2.bf16.msra.mxu0 %v562
    %603 = vmatprep.subr.bf16.mxu0 0
    %604 = vmatpush2.bf16.msra.mxu0 %v561
    %605 = vmatprep.subr.bf16.mxu0 0
    %606 = vmatpush2.bf16.msra.mxu0 %v560
    %607 = vmatprep.subr.bf16.mxu0 0
    %608 = vmatpush2.bf16.msra.mxu0 %v559
    %609 = vmatprep.subr.bf16.mxu0 0
    %610 = vmatpush2.bf16.msra.mxu0 %v558
    %611 = vmatprep.subr.bf16.mxu0 0
    %612 = vmatpush2.bf16.msra.mxu0 %v557
    %613 = vmatprep.mubr.bf16.mxu0 %v445
    %614 = vmatmul.mubr.bf16.gmra.mxu0 %v444
    %v615 = vpop.f32.mrf.mxu0
    %v616 = vadd.f32 %v483, %v615
    %v617 = vpop.f32.mrf.mxu0
    %v618 = vpop.f32.mrf.mxu0
    %v619 = vpop.f32.mrf.mxu0
    %620 = vdwg.mxu0
    %v621 = vtanh.pop %v616
    %v622 = vld [vmem:[%s7] sm:$0x1]
    %v624 = vlaneseq
    %v625 = vshrl.u32 %v624, 7
    %v626 = vsub.s32 0, %v625
    %v627 = vrot.slane %v622, %v626
    %v629 = vmul.f32 %v621, %v627
    %v630 = vld [vmem:[%s8] sm:$0x1]
    %v632 = vlaneseq
    %v633 = vshrl.u32 %v632, 7
    %v634 = vsub.s32 0, %v633
    %v635 = vrot.slane %v630, %v634
    %v637 = vadd.f32 %v629, %v635
    %v638 = vpack.c.bf16 %v637, %v637
    %639 = vst [vmem:[#allocation10] sm:$0xf] %v638
    // Predicated region
    $region54: #{tpu_custom_call.1} parent=1 // pred_check
      _
    $region55: #{tpu_custom_call.1} parent=1 // pred_check_branch
      %641 = sbr.rel (0) target = $region57
    $region56: #{tpu_custom_call.1} parent=1 // pred_region
      %s643 = ssub.s32 64, 64
      %644 = vsyncadd [#allocation4], %s643
      %s646 = sshll.u32 [#allocation10], 4
      %s647 = int_to_ptr.vmem [resolvable:$true] %s646
      %649 = dma.vmem_to_hbm [thread:$0]  %s647, 64, %s9, [#allocation4]
    $region57: #{tpu_custom_call.1} parent=1 // pred_fallthru
      _
    // Predicated region
    $region58: #{tpu_custom_call.1} parent=1 // pred_check
      _
    $region59: #{tpu_custom_call.1} parent=1 // pred_check_branch
      %651 = sbr.rel (0) target = $region61
    $region60: #{tpu_custom_call.1} parent=1 // pred_region
      %652 = dma.done [#allocation4], 64
    $region61: #{tpu_custom_call.1} parent=1 // pred_fallthru
      _
    %653 = vsyncpa [#allocation3], 1
    %654 = vsyncpa [#allocation6], 1
    %655 = vsyncpa [#allocation9], 1
    %656 = vsyncpa [#allocation4], 1

</llo_original>
